<compile_context>
chip_gen: v6e
topology: v6e:2x2x1
jax: 0.10.0
libtpu: 0.0.40
codegen_flags: <defaults>
</compile_context>

<pallas_src>
import functools

import jax
import jax.numpy as jnp
import numpy as np
from jax.experimental import pallas as pl
from jax.experimental.pallas import tpu as pltpu

_OUT_LANES = 128  # lane-dense per-tile partial vector


def _round_up(x: int, m: int) -> int:
    return (x + m - 1) // m * m


def _choose_tile_n(n: int, g: int, s_itemsize: int, lb_itemsize: int) -> int:
    """Largest row-tile that keeps the pipeline comfortably inside scoped VMEM."""
    # Double-buffered S + labels plus ~7 f32-wide temporaries (masks, e_S,
    # both where branches, loss_elem, ...).
    per_row = g * (2 * (s_itemsize + lb_itemsize) + 28)
    budget = 16 * 1024 * 1024
    t = budget // max(per_row, 1)
    t = max(32, min(2048, (t // 32) * 32))
    # Guarantee >=2 grid steps whenever N allows it, so v7x's two TensorCores
    # both get work (costs nothing on v5e/v6e).
    t = min(t, max(32, _round_up((n + 1) // 2, 32)))
    # Never exceed the row count: for small N the block equals the full dim,
    # for large N the ragged tail is masked in-kernel (no padding pass).
    return min(t, n)


def _cl_loss_kernel(s_ref, lb_ref, out_ref, *, gamma, n_rows, tile_n, eup_bf16):
    """One (TILE_N, G) tile -> per-tile partials in a (1, 128) lane-dense vector.

    Lane 0: sum of per-positive losses              (for pos_mean numerator)
    Lane 1: number of positive elements in valid rows (pos_mean denominator)
    Lane 2: number of valid rows                      (sample_mean denominator)
    Lane 3: sum over rows of (row_loss / row_cnt)     (sample_mean numerator)
    """
    S = s_ref[...].astype(jnp.float32)            # (T, G) f32 (bf16 widened here)
    lb = lb_ref[...]                              # native int dtype, no widen

    pos_b = lb == 1                               # positive-class positions
    neg_b = lb == 0                               # negative-class positions

    sum_pos = jnp.sum(pos_b.astype(jnp.float32), axis=1, keepdims=True)   # (T, 1)
    sum_neg = jnp.sum(neg_b.astype(jnp.float32), axis=1, keepdims=True)   # (T, 1)

    # Mask ragged-tail rows (the last block may extend past N; its contents are
    # undefined and MUST never reach the partial sums).
    row0 = pl.program_id(0) * tile_n
    rid = jax.lax.broadcasted_iota(jnp.int32, (tile_n, 1), 0) + row0
    in_range = rid < n_rows                                                # (T, 1)

    valid_b = (sum_pos > 0.0) & (sum_neg > 0.0) & in_range                 # (T, 1)

    if gamma is not None:
        S = S * jnp.float32(gamma)

    # Log-sum-exp stabilization: subtracting a per-row constant leaves the loss
    # unchanged but keeps exp() in range even for large gamma*S (and makes the
    # optional bf16 EUP path well conditioned).
    m = jnp.max(S, axis=1, keepdims=True)
    Sh = S - m
    if eup_bf16:
        e_S = jnp.exp(Sh.astype(jnp.bfloat16)).astype(jnp.float32)
    else:
        e_S = jnp.exp(Sh)

    # Per-row sum of exp over negative positions (junk rows are masked later).
    neg_sum = jnp.sum(jnp.where(neg_b, e_S, 0.0), axis=1, keepdims=True)   # (T, 1)

    if eup_bf16:
        log_term = jnp.log((e_S + neg_sum).astype(jnp.bfloat16)).astype(jnp.float32)
    else:
        log_term = jnp.log(e_S + neg_sum)

    # Per positive element of a valid row: -(S_pi - log(exp(S_pi) + sum_n exp(S_n))).
    sel = pos_b & valid_b                                                  # (T, G)
    loss_elem = jnp.where(sel, log_term - Sh, 0.0)

    row_loss = jnp.sum(loss_elem, axis=1, keepdims=True)                   # (T, 1)
    row_cnt = jnp.where(valid_b, sum_pos, 0.0)                             # (T, 1)
    row_sample = row_loss / jnp.maximum(row_cnt, 1.0)                      # (T, 1)
    row_valid = valid_b.astype(jnp.float32)                                # (T, 1)

    tile_loss = jnp.sum(row_loss, axis=0, keepdims=True)                   # (1, 1)
    tile_cnt = jnp.sum(row_cnt, axis=0, keepdims=True)
    tile_valid = jnp.sum(row_valid, axis=0, keepdims=True)
    tile_sample = jnp.sum(row_sample, axis=0, keepdims=True)

    lane = jax.lax.broadcasted_iota(jnp.int32, (1, _OUT_LANES), 1)
    out_ref[...] = jnp.where(
        lane == 0, tile_loss,
        jnp.where(lane == 1, tile_cnt,
                  jnp.where(lane == 2, tile_valid,
                            jnp.where(lane == 3, tile_sample, 0.0))))


def multilabel_cl_loss(S, cls_lb, gamma=None, reduce='pos_mean', tile_n=None,
                       eup_bf16=False):
    """Pallas implementation of MultiLabelCLLoss.forward.

    Args:
        S: (N, G) similarity map (float32 or bfloat16).
        cls_lb: (N, G) integer class labels (0 = negative, 1 = positive,
            anything else = ignored).  Passed to the kernel in its own dtype —
            store int8 at the source if you want the narrow-HBM path.
        eup_bf16: run exp/log through the bf16 EUP path (v6e/v7x only).
    Returns:
        scalar float32 loss.
    """
    if reduce not in ('pos_mean', 'sample_mean'):
        raise ValueError(f'unsupported reduce={reduce!r}')

    N, G = S.shape
    if cls_lb.shape != (N, G):
        raise ValueError('S and cls_lb shape mismatch')

    if tile_n is None:
        tile_n = _choose_tile_n(N, G, jnp.dtype(S.dtype).itemsize,
                                jnp.dtype(cls_lb.dtype).itemsize)
    else:
        tile_n = int(tile_n)
        tile_n = N if tile_n >= N else max(8, (tile_n // 8) * 8)
    num_tiles = pl.cdiv(N, tile_n)

    kernel = functools.partial(
        _cl_loss_kernel,
        gamma=None if gamma is None else float(gamma),
        n_rows=N, tile_n=tile_n, eup_bf16=bool(eup_bf16))

    partials = pl.pallas_call(
        kernel,
        out_shape=jax.ShapeDtypeStruct((num_tiles, _OUT_LANES), jnp.float32),
        grid=(num_tiles,),
        in_specs=[
            pl.BlockSpec((tile_n, G), lambda i: (i, 0)),
            pl.BlockSpec((tile_n, G), lambda i: (i, 0)),
        ],
        out_specs=pl.BlockSpec((1, _OUT_LANES), lambda i: (i, 0)),
        compiler_params=pltpu.CompilerParams(
            dimension_semantics=("parallel",),
            vmem_limit_bytes=40 * 1024 * 1024),
    )(S, cls_lb)

    totals = jnp.sum(partials, axis=0)                 # (128,) tiny XLA reduce
    loss_sum = totals[0]
    pos_cnt = totals[1]
    valid_num = totals[2]
    sample_sum = totals[3]

    if reduce == 'pos_mean':
        loss = loss_sum / jnp.maximum(pos_cnt, 1.0)
    else:  # 'sample_mean'
        loss = sample_sum / jnp.maximum(valid_num, 1.0)

    # valid_anchor_num == 0  ->  PyTorch returns S.mean() * 0 == 0.0
    return jnp.where(valid_num > 0.0, loss, jnp.float32(0.0))


def _reference(S, cls_lb, gamma=None, reduce='pos_mean'):
    """Pure-numpy mirror of the PyTorch forward, for verification."""
    S = np.asarray(S, dtype=np.float64)
    lb = np.asarray(cls_lb)
    valid = np.any(lb == 0, axis=1) & np.any(lb == 1, axis=1)
    if valid.sum() == 0:
        return 0.0
    neg_mask = (lb == 0) & valid[:, None]
    pos_mask = (lb == 1) & valid[:, None]
    pi_a = np.nonzero(pos_mask)[0]
    pi_I = pos_mask.sum(axis=1)[pi_a]
    if gamma is not None:
        S = gamma * S
    e_S = np.exp(S)
    sigma_neg = (e_S * neg_mask).sum(axis=1)
    Spi = S[pos_mask]
    e_Spi = e_S[pos_mask]
    pi_sigma = sigma_neg[pi_a]
    pi_loss = -(Spi - np.log(e_Spi + pi_sigma))
    if reduce == 'pos_mean':
        return pi_loss.mean()
    elif reduce == 'sample_mean':
        return (pi_loss / pi_I).sum() / valid.sum()
    raise ValueError(reduce)


if __name__ == "__main__":
    key = jax.random.PRNGKey(0)
    k_s, k_lb, k_s2, k_lb2, k_s3, k_lb3 = jax.random.split(key, 6)

    # -- config 1: small shape, defaults (gamma=None, reduce='pos_mean') -------
    N, G = 8, 128
    S = jax.random.normal(k_s, (N, G), dtype=jnp.float32)
    cls_lb = jax.random.randint(k_lb, (N, G), -1, 2, dtype=jnp.int32)

    out1 = multilabel_cl_loss(S, cls_lb, gamma=None, reduce='pos_mean')
    jax.block_until_ready(out1)
    ref1 = _reference(S, cls_lb, gamma=None, reduce='pos_mean')
    assert np.allclose(np.asarray(out1), ref1, rtol=1e-4, atol=1e-5), (out1, ref1)

    # -- config 2: gamma scaling + sample_mean reduction ------------------------
    out2 = multilabel_cl_loss(S, cls_lb, gamma=2.0, reduce='sample_mean')
    jax.block_until_ready(out2)
    ref2 = _reference(S, cls_lb, gamma=2.0, reduce='sample_mean')
    assert np.allclose(np.asarray(out2), ref2, rtol=1e-4, atol=1e-5), (out2, ref2)

    # -- config 3: ragged multi-tile path (N not a tile multiple, no padding) ---
    N3, G3 = 100, 256
    S3 = jax.random.normal(k_s2, (N3, G3), dtype=jnp.float32)
    cls_lb3 = jax.random.randint(k_lb2, (N3, G3), -1, 2, dtype=jnp.int32)
    out3 = multilabel_cl_loss(S3, cls_lb3, gamma=1.5, reduce='sample_mean',
                              tile_n=32)
    jax.block_until_ready(out3)
    ref3 = _reference(S3, cls_lb3, gamma=1.5, reduce='sample_mean')
    assert np.allclose(np.asarray(out3), ref3, rtol=1e-4, atol=1e-5), (out3, ref3)

    out3b = multilabel_cl_loss(S3, cls_lb3, gamma=None, reduce='pos_mean',
                               tile_n=32)
    jax.block_until_ready(out3b)
    ref3b = _reference(S3, cls_lb3, gamma=None, reduce='pos_mean')
    assert np.allclose(np.asarray(out3b), ref3b, rtol=1e-4, atol=1e-5), (out3b, ref3b)

    # -- config 4: bf16 similarities (narrow HBM path, labels stay int32) -------
    S_bf16 = S.astype(jnp.bfloat16)
    out4 = multilabel_cl_loss(S_bf16, cls_lb, gamma=None, reduce='pos_mean')
    jax.block_until_ready(out4)
    ref4 = _reference(np.asarray(S_bf16.astype(jnp.float32)), cls_lb,
                      gamma=None, reduce='pos_mean')
    assert np.allclose(np.asarray(out4), ref4, rtol=1e-3, atol=1e-3), (out4, ref4)

    # -- config 5: int8 labels at the source (narrowest wire, no wrapper cast) --
    N5, G5 = 64, 128
    S5 = jax.random.normal(k_s3, (N5, G5), dtype=jnp.float32)
    cls_lb5 = jax.random.randint(k_lb3, (N5, G5), -1, 2, dtype=jnp.int32)
    cls_lb5_i8 = cls_lb5.astype(jnp.int8)  # caller-side storage format
    out5 = multilabel_cl_loss(S5, cls_lb5_i8, gamma=0.5, reduce='pos_mean')
    jax.block_until_ready(out5)
    ref5 = _reference(S5, cls_lb5, gamma=0.5, reduce='pos_mean')
    assert np.allclose(np.asarray(out5), ref5, rtol=1e-4, atol=1e-5), (out5, ref5)

    # -- config 6: no valid anchors -> loss must be exactly 0 -------------------
    lb_none = jnp.full((N, G), -1, dtype=jnp.int32)
    out6 = multilabel_cl_loss(S, lb_none, gamma=None, reduce='pos_mean')
    jax.block_until_ready(out6)
    assert np.allclose(np.asarray(out6), 0.0, atol=1e-7), out6

    # -- config 7: bf16 EUP path (v6e/v7x micro-opt), relaxed tolerance ---------
    out7 = multilabel_cl_loss(S5, cls_lb5, gamma=None, reduce='pos_mean',
                              eup_bf16=True)
    jax.block_until_ready(out7)
    ref7 = _reference(S5, cls_lb5, gamma=None, reduce='pos_mean')
    assert np.allclose(np.asarray(out7), ref7, rtol=5e-2, atol=5e-2), (out7, ref7)

    print("KERNEL_OK")
</pallas_src>

<mosaic_0001>
module attributes {stable_mosaic.version = 11 : i64} {
  func.func @_cl_loss_kernel(%arg0: i32, %arg1: memref<8x128xf32, #tpu.memory_space<vmem>>, %arg2: memref<8x128xi32, #tpu.memory_space<vmem>>, %arg3: memref<1x128xf32, #tpu.memory_space<vmem>>) attributes {dimension_semantics = [#tpu.dimension_semantics<parallel>], iteration_bounds = array<i64: 1>, scalar_prefetch = 0 : i64, scratch_operands = 0 : i64, tpu.core_type = #tpu.core_type<tc>, window_params = [{transform_indices = @transform_0, window_bounds = array<i64: 8, 128>}, {transform_indices = @transform_1, window_bounds = array<i64: 8, 128>}, {transform_indices = @transform_2, window_bounds = array<i64: 1, 128>}]} {
    %c0 = arith.constant 0 : index
    %c0_0 = arith.constant 0 : index
    %0 = vector.load %arg1[%c0, %c0_0] : memref<8x128xf32, #tpu.memory_space<vmem>>, vector<8x128xf32>
    %c0_1 = arith.constant 0 : index
    %c0_2 = arith.constant 0 : index
    %1 = vector.load %arg2[%c0_1, %c0_2] : memref<8x128xi32, #tpu.memory_space<vmem>>, vector<8x128xi32>
    %c1_i32 = arith.constant 1 : i32
    %2 = vector.broadcast %c1_i32 : i32 to vector<8x128xi32>
    %3 = arith.cmpi eq, %1, %2 : vector<8x128xi32>
    %c0_i32 = arith.constant 0 : i32
    %4 = vector.broadcast %c0_i32 : i32 to vector<8x128xi32>
    %5 = arith.cmpi eq, %1, %4 : vector<8x128xi32>
    %6 = arith.extui %3 : vector<8x128xi1> to vector<8x128xi32>
    %7 = arith.sitofp %6 : vector<8x128xi32> to vector<8x128xf32>
    %cst = arith.constant dense<0.000000e+00> : vector<8xf32>
    %8 = vector.multi_reduction <add>, %7, %cst [1] : vector<8x128xf32> to vector<8xf32>
    %9 = vector.shape_cast %8 : vector<8xf32> to vector<8x1xf32>
    %10 = arith.extui %5 : vector<8x128xi1> to vector<8x128xi32>
    %11 = arith.sitofp %10 : vector<8x128xi32> to vector<8x128xf32>
    %cst_3 = arith.constant dense<0.000000e+00> : vector<8xf32>
    %12 = vector.multi_reduction <add>, %11, %cst_3 [1] : vector<8x128xf32> to vector<8xf32>
    %13 = vector.shape_cast %12 : vector<8xf32> to vector<8x1xf32>
    %c8_i32 = arith.constant 8 : i32
    %14 = arith.muli %arg0, %c8_i32 : i32
    %15 = tpu.iota {dimensions = array<i32: 0>} : vector<8x1xi32>
    %16 = vector.broadcast %14 : i32 to vector<8x1xi32>
    %17 = arith.addi %15, %16 : vector<8x1xi32>
    %c8_i32_4 = arith.constant 8 : i32
    %18 = vector.broadcast %c8_i32_4 : i32 to vector<8x1xi32>
    %19 = arith.cmpi slt, %17, %18 : vector<8x1xi32>
    %cst_5 = arith.constant 0.000000e+00 : f32
    %20 = vector.broadcast %cst_5 : f32 to vector<8x1xf32>
    %21 = arith.cmpf ogt, %9, %20 : vector<8x1xf32>
    %cst_6 = arith.constant 0.000000e+00 : f32
    %22 = vector.broadcast %cst_6 : f32 to vector<8x1xf32>
    %23 = arith.cmpf ogt, %13, %22 : vector<8x1xf32>
    %24 = arith.andi %21, %23 : vector<8x1xi1>
    %25 = arith.andi %24, %19 : vector<8x1xi1>
    %cst_7 = arith.constant dense<0xFF800000> : vector<8xf32>
    %26 = vector.multi_reduction <maximumf>, %0, %cst_7 [1] : vector<8x128xf32> to vector<8xf32>
    %27 = vector.shape_cast %26 : vector<8xf32> to vector<8x1xf32>
    %28 = vector.broadcast %27 : vector<8x1xf32> to vector<8x128xf32>
    %29 = arith.subf %0, %28 : vector<8x128xf32>
    %30 = math.exp %29 : vector<8x128xf32>
    %cst_8 = arith.constant 0.000000e+00 : f32
    %31 = vector.broadcast %cst_8 : f32 to vector<8x128xf32>
    %32 = arith.select %5, %30, %31 : vector<8x128xi1>, vector<8x128xf32>
    %cst_9 = arith.constant dense<0.000000e+00> : vector<8xf32>
    %33 = vector.multi_reduction <add>, %32, %cst_9 [1] : vector<8x128xf32> to vector<8xf32>
    %34 = vector.shape_cast %33 : vector<8xf32> to vector<8x1xf32>
    %35 = vector.broadcast %34 : vector<8x1xf32> to vector<8x128xf32>
    %36 = arith.addf %30, %35 : vector<8x128xf32>
    %37 = math.log %36 : vector<8x128xf32>
    %38 = vector.broadcast %25 : vector<8x1xi1> to vector<8x128xi1>
    %39 = arith.andi %3, %38 : vector<8x128xi1>
    %40 = arith.subf %37, %29 : vector<8x128xf32>
    %cst_10 = arith.constant 0.000000e+00 : f32
    %41 = vector.broadcast %cst_10 : f32 to vector<8x128xf32>
    %42 = arith.select %39, %40, %41 : vector<8x128xi1>, vector<8x128xf32>
    %cst_11 = arith.constant dense<0.000000e+00> : vector<8xf32>
    %43 = vector.multi_reduction <add>, %42, %cst_11 [1] : vector<8x128xf32> to vector<8xf32>
    %44 = vector.shape_cast %43 : vector<8xf32> to vector<8x1xf32>
    %cst_12 = arith.constant 0.000000e+00 : f32
    %45 = vector.broadcast %cst_12 : f32 to vector<8x1xf32>
    %46 = arith.select %25, %9, %45 : vector<8x1xi1>, vector<8x1xf32>
    %cst_13 = arith.constant 1.000000e+00 : f32
    %47 = vector.broadcast %cst_13 : f32 to vector<8x1xf32>
    %48 = arith.maximumf %46, %47 : vector<8x1xf32>
    %49 = arith.divf %44, %48 : vector<8x1xf32>
    %50 = arith.extui %25 : vector<8x1xi1> to vector<8x1xi32>
    %51 = arith.sitofp %50 : vector<8x1xi32> to vector<8x1xf32>
    %cst_14 = arith.constant dense<0.000000e+00> : vector<1xf32>
    %52 = vector.multi_reduction <add>, %44, %cst_14 [0] : vector<8x1xf32> to vector<1xf32>
    %53 = vector.shape_cast %52 : vector<1xf32> to vector<1x1xf32>
    %cst_15 = arith.constant dense<0.000000e+00> : vector<1xf32>
    %54 = vector.multi_reduction <add>, %46, %cst_15 [0] : vector<8x1xf32> to vector<1xf32>
    %55 = vector.shape_cast %54 : vector<1xf32> to vector<1x1xf32>
    %cst_16 = arith.constant dense<0.000000e+00> : vector<1xf32>
    %56 = vector.multi_reduction <add>, %51, %cst_16 [0] : vector<8x1xf32> to vector<1xf32>
    %57 = vector.shape_cast %56 : vector<1xf32> to vector<1x1xf32>
    %cst_17 = arith.constant dense<0.000000e+00> : vector<1xf32>
    %58 = vector.multi_reduction <add>, %49, %cst_17 [0] : vector<8x1xf32> to vector<1xf32>
    %59 = vector.shape_cast %58 : vector<1xf32> to vector<1x1xf32>
    %60 = tpu.iota {dimensions = array<i32: 1>} : vector<1x128xi32>
    %c0_i32_18 = arith.constant 0 : i32
    %61 = vector.broadcast %c0_i32_18 : i32 to vector<1x128xi32>
    %62 = arith.cmpi eq, %60, %61 : vector<1x128xi32>
    %c1_i32_19 = arith.constant 1 : i32
    %63 = vector.broadcast %c1_i32_19 : i32 to vector<1x128xi32>
    %64 = arith.cmpi eq, %60, %63 : vector<1x128xi32>
    %c2_i32 = arith.constant 2 : i32
    %65 = vector.broadcast %c2_i32 : i32 to vector<1x128xi32>
    %66 = arith.cmpi eq, %60, %65 : vector<1x128xi32>
    %c3_i32 = arith.constant 3 : i32
    %67 = vector.broadcast %c3_i32 : i32 to vector<1x128xi32>
    %68 = arith.cmpi eq, %60, %67 : vector<1x128xi32>
    %cst_20 = arith.constant 0.000000e+00 : f32
    %69 = vector.shape_cast %59 : vector<1x1xf32> to vector<1x1xf32>
    %70 = vector.broadcast %69 : vector<1x1xf32> to vector<1x128xf32>
    %71 = vector.broadcast %cst_20 : f32 to vector<1x128xf32>
    %72 = arith.select %68, %70, %71 : vector<1x128xi1>, vector<1x128xf32>
    %73 = vector.shape_cast %57 : vector<1x1xf32> to vector<1x1xf32>
    %74 = vector.broadcast %73 : vector<1x1xf32> to vector<1x128xf32>
    %75 = arith.select %66, %74, %72 : vector<1x128xi1>, vector<1x128xf32>
    %76 = vector.shape_cast %55 : vector<1x1xf32> to vector<1x1xf32>
    %77 = vector.broadcast %76 : vector<1x1xf32> to vector<1x128xf32>
    %78 = arith.select %64, %77, %75 : vector<1x128xi1>, vector<1x128xf32>
    %79 = vector.shape_cast %53 : vector<1x1xf32> to vector<1x1xf32>
    %80 = vector.broadcast %79 : vector<1x1xf32> to vector<1x128xf32>
    %81 = arith.select %62, %80, %78 : vector<1x128xi1>, vector<1x128xf32>
    %c0_21 = arith.constant 0 : index
    %c0_22 = arith.constant 0 : index
    %82 = vector.load %arg3[%c0_21, %c0_22] : memref<1x128xf32, #tpu.memory_space<vmem>>, vector<1x128xf32>
    tpu.vector_store %arg3[%c0_21, %c0_22], %81 {strides = array<i32>} : memref<1x128xf32, #tpu.memory_space<vmem>>, vector<1x128xf32>,
    return
  }
  func.func @transform_0(%arg0: i32) -> (i32, i32) {
    %c0_i32 = arith.constant 0 : i32
    %c0_i32_0 = arith.constant 0 : i32
    return %arg0, %c0_i32 : i32, i32
  }
  func.func @transform_1(%arg0: i32) -> (i32, i32) {
    %c0_i32 = arith.constant 0 : i32
    %c0_i32_0 = arith.constant 0 : i32
    return %arg0, %c0_i32 : i32, i32
  }
  func.func @transform_2(%arg0: i32) -> (i32, i32) {
    %c0_i32 = arith.constant 0 : i32
    %c0_i32_0 = arith.constant 0 : i32
    return %arg0, %c0_i32 : i32, i32
  }
}

</mosaic_0001>

<llo_original>
// kernel: tpu_custom_call.1
$region0: #{tpu_custom_call.1}
  #allocation0 [shape = 'u32[]', space=smem, size = 0x4, offset = 0x4, fixed_abs, tag = 'smem constant byte address 0x4 - core index']
  #allocation1 [shape = 'u32[144,128]{1,0:T(1,128)}', space=vmem, size = 0x12000, scoped, tag = 'internal scratch']
  %s0 = inlined_call_operand.hbm [shape: f32[8,128], index: 0, kind: input, shape index: {}]
  %s1 = inlined_call_operand.hbm [shape: s32[8,128], index: 1, kind: input, shape index: {}]
  %s2 = inlined_call_operand.hbm [shape: f32[1,128], index: 2, kind: output, shape index: {}]
  %s3 = sld [smem:[#allocation0]]
  $region26: #{tpu_custom_call.1} parent=0
    _
  %s5 = ssub.s32 1, %s3
  %s6 = scalar_select 0, %s5, %s3
  $region1: #{tpu_custom_call.1} parent=0
    #allocation2 [shape = 'u8[4096]{0}', space=vmem, size = 0x1000, scoped, tag = 'input window, operand 0, single buffered']
    #allocation3 [shape = 's32[1]{0}', space=sflag, size = 0x4, scoped, tag = 'scoped memory for tpu_custom_call.1']
    #allocation4 [shape = 's32[1]{0}', space=sflag, size = 0x4, scoped, tag = 'scoped memory for tpu_custom_call.1']
    #allocation5 [shape = 'u8[4096]{0}', space=vmem, size = 0x1000, scoped, tag = 'input window, operand 1, single buffered']
    #allocation6 [shape = 's32[1]{0}', space=sflag, size = 0x4, scoped, tag = 'scoped memory for tpu_custom_call.1']
    #allocation7 [shape = 'u8[512]{0}', space=vmem, size = 0x400, scoped, tag = 'output window, operand 0, single buffered']
    %7 = vsyncpa [#allocation3], 0
    %8 = vsyncpa [#allocation6], 0
    %9 = vsyncpa [#allocation4], 0
    // Predicated region
    $region2: #{tpu_custom_call.1} parent=1 // pred_check
      _
    $region3: #{tpu_custom_call.1} parent=1 // pred_check_branch
      %11 = sbr.rel (0) target = $region5
    $region4: #{tpu_custom_call.1} parent=1 // pred_region
      %s13 = ssub.s32 128, 128
      %14 = vsyncadd [#allocation3], %s13
      %s16 = sshll.u32 [#allocation2], 4
      %s17 = int_to_ptr.vmem [resolvable:$true] %s16
      %19 = dma.hbm_to_vmem [thread:$0]  %s0, 128, %s17, [#allocation3]
    $region5: #{tpu_custom_call.1} parent=1 // pred_fallthru
      _
    // Predicated region
    $region6: #{tpu_custom_call.1} parent=1 // pred_check
      _
    $region7: #{tpu_custom_call.1} parent=1 // pred_check_branch
      %21 = sbr.rel (0) target = $region9
    $region8: #{tpu_custom_call.1} parent=1 // pred_region
      %s23 = ssub.s32 128, 128
      %24 = vsyncadd [#allocation6], %s23
      %s26 = sshll.u32 [#allocation5], 4
      %s27 = int_to_ptr.vmem [resolvable:$true] %s26
      %29 = dma.hbm_to_vmem [thread:$0]  %s1, 128, %s27, [#allocation6]
    $region9: #{tpu_custom_call.1} parent=1 // pred_fallthru
      _
    // Predicated region
    $region10: #{tpu_custom_call.1} parent=1 // pred_check
      _
    $region11: #{tpu_custom_call.1} parent=1 // pred_check_branch
      %31 = sbr.rel (0) target = $region13
    $region12: #{tpu_custom_call.1} parent=1 // pred_region
      %32 = dma.done [#allocation3], 128
    $region13: #{tpu_custom_call.1} parent=1 // pred_fallthru
      _
    // Predicated region
    $region14: #{tpu_custom_call.1} parent=1 // pred_check
      _
    $region15: #{tpu_custom_call.1} parent=1 // pred_check_branch
      %34 = sbr.rel (0) target = $region17
    $region16: #{tpu_custom_call.1} parent=1 // pred_region
      %35 = dma.done [#allocation6], 128
    $region17: #{tpu_custom_call.1} parent=1 // pred_fallthru
      _
    %v36 = vld [vmem:[#allocation2] sm:$0xff]
    %v37 = vld [vmem:[#allocation5] sm:$0xff]
    %vm38 = vcmp.eq.s32.totalorder %v37, 1
    %vm39 = vcmp.eq.s32.totalorder %v37, 0
    %v40 = vsel %vm38, 1, 0
    %v41 = vcvt.s32.f32 %v40
    %42 = vadd.xlane.f32.xlu0 %v41
    %v43 = vpop.xlane.xlu0 %42
    %v44 = vsel %vm39, 1, 0
    %v45 = vcvt.s32.f32 %v44
    %46 = vadd.xlane.f32.xlu0 %v45
    %v47 = vpop.xlane.xlu0 %46
    %s48 = smul.u32 0, 8
    %v49 = vlaneseq
    %v50 = vshrl.u32 %v49, 7
    %v51 = vstv %s48
    %v52 = vadd.s32 %v50, %v51
    %vm53 = vcmp.lt.s32.totalorder %v52, 8
    %vm54 = vcmp.gt.f32.partialorder %v43, 0.0
    %vm55 = vcmp.gt.f32.partialorder %v47, 0.0
    %vm56 = vmand %vm54, %vm55
    %vm57 = vmand %vm56, %vm53
    %58 = vmax.xlane.f32.xlu0 %v36
    %v59 = vpop.xlane.xlu0 %58
    %v60 = vsub.f32 %v36, %v59
    %v61 = vmul.f32 %v60, 1.442695
    %v62 = vpow.pop %v61
    %v63 = vsel %vm39, %v62, 0.0
    %64 = vadd.xlane.f32.xlu0 %v63
    %v65 = vpop.xlane.xlu0 %64
    %v66 = vadd.f32 %v62, %v65
    %v67 = vlog2.pop %v66
    %v68 = vmul.f32 %v67, 0.6931472
    %v69 = vsel %vm57, 1, 0
    %vm70 = vcmp.eq.s32.totalorder %v69, 1
    %vm71 = vmand %vm38, %vm70
    %v72 = vsub.f32 %v68, %v60
    %v73 = vsel %vm71, %v72, 0.0
    %74 = vadd.xlane.f32.xlu0 %v73
    %v75 = vpop.xlane.xlu0 %74
    %v76 = vsel %vm57, %v43, 0.0
    %v77 = vmax.f32 %v76, 1.0
    %v78 = vrcp.pop %v77
    %v79 = vmul.f32 %v75, %v78
    %v80 = vcvt.s32.f32 %v69
    %v81 = vrot.slane %v75, 4
    %v82 = vadd.f32 %v75, %v81
    %v83 = vrot.slane %v82, 2
    %v84 = vadd.f32 %v82, %v83
    %v85 = vrot.slane %v84, 1
    %v86 = vadd.f32 %v84, %v85
    %v87 = vrot.slane %v76, 4
    %v88 = vadd.f32 %v76, %v87
    %v89 = vrot.slane %v88, 2
    %v90 = vadd.f32 %v88, %v89
    %v91 = vrot.slane %v90, 1
    %v92 = vadd.f32 %v90, %v91
    %v93 = vrot.slane %v80, 4
    %v94 = vadd.f32 %v80, %v93
    %v95 = vrot.slane %v94, 2
    %v96 = vadd.f32 %v94, %v95
    %v97 = vrot.slane %v96, 1
    %v98 = vadd.f32 %v96, %v97
    %v99 = vrot.slane %v79, 4
    %v100 = vadd.f32 %v79, %v99
    %v101 = vrot.slane %v100, 2
    %v102 = vadd.f32 %v100, %v101
    %v103 = vrot.slane %v102, 1
    %v104 = vadd.f32 %v102, %v103
    %v105 = vlaneseq
    %v106 = vand.u32 %v105, 127
    %vm107 = vcmp.eq.s32.totalorder %v106, 0
    %vm108 = vcmp.eq.s32.totalorder %v106, 1
    %vm109 = vcmp.eq.s32.totalorder %v106, 2
    %vm110 = vcmp.eq.s32.totalorder %v106, 3
    %v111 = vsel %vm110, %v104, 0.0
    %v112 = vsel %vm109, %v98, %v111
    %v113 = vsel %vm108, %v92, %v112
    %v114 = vsel %vm107, %v86, %v113
    %115 = vst [vmem:[#allocation7] sm:$0x1] %v114
    // Predicated region
    $region18: #{tpu_custom_call.1} parent=1 // pred_check
      _
    $region19: #{tpu_custom_call.1} parent=1 // pred_check_branch
      %117 = sbr.rel (0) target = $region21
    $region20: #{tpu_custom_call.1} parent=1 // pred_region
      %s119 = ssub.s32 16, 16
      %120 = vsyncadd [#allocation4], %s119
      %s122 = sshll.u32 [#allocation7], 4
      %s123 = int_to_ptr.vmem [resolvable:$true] %s122
      %125 = dma.vmem_to_hbm [thread:$0]  %s123, 16, %s2, [#allocation4]
    $region21: #{tpu_custom_call.1} parent=1 // pred_fallthru
      _
    // Predicated region
    $region22: #{tpu_custom_call.1} parent=1 // pred_check
      _
    $region23: #{tpu_custom_call.1} parent=1 // pred_check_branch
      %127 = sbr.rel (0) target = $region25
    $region24: #{tpu_custom_call.1} parent=1 // pred_region
      %128 = dma.done [#allocation4], 16
    $region25: #{tpu_custom_call.1} parent=1 // pred_fallthru
      _
    %129 = vsyncpa [#allocation3], 1
    %130 = vsyncpa [#allocation6], 1
    %131 = vsyncpa [#allocation4], 1

</llo_original>
